<compile_context>
chip_gen: v7x
topology: tpu7x:2x2x1
jax: 0.10.0
libtpu: 0.0.40
codegen_flags: <defaults>
</compile_context>

<pallas_src>
import functools

import jax
import jax.numpy as jnp
from jax.experimental import pallas as pl
from jax.experimental.pallas import tpu as pltpu


def _round_up(v, m):
    return (v + m - 1) // m * m


def _simam_kernel(x_ref, o_ref, *, inv_hw, inv_n, e_lambda):
    # x_ref / o_ref: (TR, HW) — one row per (batch, channel), spatial on the lane axis.
    x = x_ref[...].astype(jnp.float32)

    # One-pass statistics: two independent XLU row reductions (no reduce->broadcast
    # ->elementwise->reduce serialization on the per-tile critical path).
    sum_x = jnp.sum(x, axis=-1, keepdims=True)          # (TR, 1)
    sum_x2 = jnp.sum(x * x, axis=-1, keepdims=True)     # (TR, 1)

    mu = sum_x * inv_hw                                 # per-(b,c) spatial mean
    s = sum_x2 - sum_x * mu                             # sum((x - mu)^2) per row

    # Per-row reciprocal of the energy denominator: only (TR, 1) wide — cheap exact
    # divide on TR scalars; never a full-width per-element divide.
    inv_den = 0.25 / (s * inv_n + e_lambda)             # (TR, 1)

    d = x - mu
    y = (d * d) * inv_den + 0.5                         # energy term, full-width mul+add only
    att = jax.nn.sigmoid(y)                             # EUP logistic (exp), no exact divide

    o_ref[...] = (x * att).astype(o_ref.dtype)


def simam(
    x_nchw,
    e_lambda=1e-4,
    *,
    vmem_budget_bytes=12 * 1024 * 1024,    # budget for the 4 pipelined buffers (2x in + 2x out)
    vmem_limit_bytes=48 * 1024 * 1024,     # < v7x 64 MiB physical; >> v5e 16 MiB scoped default
):
    """SimAM.forward: x * sigmoid((x-mu)^2 / (4*(sum((x-mu)^2)/n + lambda)) + 0.5)."""
    N, C, H, W = x_nchw.shape
    HW = H * W
    BC = N * C
    n = HW - 1
    # Note: PyTorch would divide by zero when H*W == 1 (n == 0); we clamp to 1 instead.
    inv_n = 1.0 / float(max(n, 1))

    # Row-major reshape: (N, C, H, W) -> (N*C, H*W).  Free view, no transpose.
    x2d = x_nchw.reshape(BC, HW)
    itemsize = jnp.dtype(x2d.dtype).itemsize
    row_bytes = HW * itemsize

    # Tile rows so the 4 pipelined buffers (2x input + 2x output) fit the budget.
    max_rows = max(8, (vmem_budget_bytes // (4 * row_bytes)) // 8 * 8)
    # TODO(synk): add a column-chunking path (second "arbitrary" grid axis over HW with
    # sum_x / sum_x2 scratch accumulators) for huge H*W where even an 8-row tile
    # overshoots the budget; with typical feature-map sizes this never triggers.

    if BC < 8:
        tr = BC                                  # block row-dim == full array dim is always legal
    else:
        tr = min(max_rows, (BC // 8) * 8)        # multiple of 8 sublanes
        if BC >= 16:
            # Guarantee >= 2 grid steps (megacore split on v7x + DMA/compute overlap),
            # while keeping tiles as large as the budget otherwise allows.
            tr = min(tr, max(8, _round_up(pl.cdiv(BC, 2), 8)))
        tr = max(8, tr)

    grid_steps = pl.cdiv(BC, tr)                 # edge block -> masked stores; no pad/slice passes

    kernel = functools.partial(
        _simam_kernel,
        inv_hw=1.0 / float(HW),
        inv_n=inv_n,
        e_lambda=float(e_lambda),
    )

    cost = pl.CostEstimate(
        flops=10 * BC * HW,                 # elementwise ops + two row reductions
        transcendentals=BC * HW,            # one logistic per element
        bytes_accessed=2 * BC * HW * itemsize,
    )

    out2d = pl.pallas_call(
        kernel,
        out_shape=jax.ShapeDtypeStruct((BC, HW), x2d.dtype),
        grid=(grid_steps,),
        in_specs=[pl.BlockSpec((tr, HW), lambda i: (i, 0))],
        out_specs=pl.BlockSpec((tr, HW), lambda i: (i, 0)),
        compiler_params=pltpu.CompilerParams(
            dimension_semantics=("parallel",),
            vmem_limit_bytes=vmem_limit_bytes,
        ),
        cost_estimate=cost,
    )(x2d)

    return out2d.reshape(N, C, H, W)


if __name__ == "__main__":
    key = jax.random.PRNGKey(0)
    N, C, H, W = 2, 4, 16, 16
    e_lambda = 1e-4

    x = jax.random.normal(key, (N, C, H, W), jnp.float32)

    out = simam(x, e_lambda=e_lambda)
    out = jax.block_until_ready(out)

    # Pure-JAX reference mirroring the PyTorch forward exactly.
    n = H * W - 1
    mu = x.mean(axis=(2, 3), keepdims=True)
    d2 = (x - mu) ** 2
    y = d2 / (4.0 * (d2.sum(axis=(2, 3), keepdims=True) / n + e_lambda)) + 0.5
    ref = x * jax.nn.sigmoid(y)

    assert out.shape == (N, C, H, W)
    assert jnp.allclose(out, ref, atol=1e-5, rtol=1e-5), "mismatch vs reference"
    print("KERNEL_OK")
</pallas_src>

<mosaic_0001>
module attributes {stable_mosaic.version = 11 : i64} {
  func.func @_simam_kernel(%arg0: i32, %arg1: memref<8x256xf32, #tpu.memory_space<vmem>>, %arg2: memref<8x256xf32, #tpu.memory_space<vmem>>) attributes {dimension_semantics = [#tpu.dimension_semantics<parallel>], iteration_bounds = array<i64: 1>, scalar_prefetch = 0 : i64, scratch_operands = 0 : i64, tpu.core_type = #tpu.core_type<tc>, window_params = [{transform_indices = @transform_0, window_bounds = array<i64: 8, 256>}, {transform_indices = @transform_1, window_bounds = array<i64: 8, 256>}]} {
    %c0 = arith.constant 0 : index
    %c0_0 = arith.constant 0 : index
    %0 = vector.load %arg1[%c0, %c0_0] : memref<8x256xf32, #tpu.memory_space<vmem>>, vector<8x256xf32>
    %cst = arith.constant dense<0.000000e+00> : vector<8xf32>
    %1 = vector.multi_reduction <add>, %0, %cst [1] : vector<8x256xf32> to vector<8xf32>
    %2 = vector.shape_cast %1 : vector<8xf32> to vector<8x1xf32>
    %3 = arith.mulf %0, %0 : vector<8x256xf32>
    %cst_1 = arith.constant dense<0.000000e+00> : vector<8xf32>
    %4 = vector.multi_reduction <add>, %3, %cst_1 [1] : vector<8x256xf32> to vector<8xf32>
    %5 = vector.shape_cast %4 : vector<8xf32> to vector<8x1xf32>
    %cst_2 = arith.constant 3.906250e-03 : f32
    %6 = vector.broadcast %cst_2 : f32 to vector<8x1xf32>
    %7 = arith.mulf %2, %6 : vector<8x1xf32>
    %8 = arith.mulf %2, %7 : vector<8x1xf32>
    %9 = arith.subf %5, %8 : vector<8x1xf32>
    %cst_3 = arith.constant 0.00392156886 : f32
    %10 = vector.broadcast %cst_3 : f32 to vector<8x1xf32>
    %11 = arith.mulf %9, %10 : vector<8x1xf32>
    %cst_4 = arith.constant 9.99999974E-5 : f32
    %12 = vector.broadcast %cst_4 : f32 to vector<8x1xf32>
    %13 = arith.addf %11, %12 : vector<8x1xf32>
    %cst_5 = arith.constant 2.500000e-01 : f32
    %14 = vector.broadcast %cst_5 : f32 to vector<8x1xf32>
    %15 = arith.divf %14, %13 : vector<8x1xf32>
    %16 = vector.broadcast %7 : vector<8x1xf32> to vector<8x256xf32>
    %17 = arith.subf %0, %16 : vector<8x256xf32>
    %18 = arith.mulf %17, %17 : vector<8x256xf32>
    %19 = vector.broadcast %15 : vector<8x1xf32> to vector<8x256xf32>
    %20 = arith.mulf %18, %19 : vector<8x256xf32>
    %cst_6 = arith.constant 5.000000e-01 : f32
    %21 = vector.broadcast %cst_6 : f32 to vector<8x256xf32>
    %22 = arith.addf %20, %21 : vector<8x256xf32>
    %23 = arith.negf %22 : vector<8x256xf32>
    %24 = math.exp %23 : vector<8x256xf32>
    %cst_7 = arith.constant 1.000000e+00 : f32
    %25 = vector.broadcast %cst_7 : f32 to vector<8x256xf32>
    %26 = arith.addf %25, %24 : vector<8x256xf32>
    %27 = arith.divf %25, %26 : vector<8x256xf32>
    %28 = arith.mulf %0, %27 : vector<8x256xf32>
    %c0_8 = arith.constant 0 : index
    %c0_9 = arith.constant 0 : index
    %29 = vector.load %arg2[%c0_8, %c0_9] : memref<8x256xf32, #tpu.memory_space<vmem>>, vector<8x256xf32>
    tpu.vector_store %arg2[%c0_8, %c0_9], %28 {strides = array<i32>} : memref<8x256xf32, #tpu.memory_space<vmem>>, vector<8x256xf32>,
    return
  }
  func.func @transform_0(%arg0: i32) -> (i32, i32) {
    %c0_i32 = arith.constant 0 : i32
    %c0_i32_0 = arith.constant 0 : i32
    return %arg0, %c0_i32 : i32, i32
  }
  func.func @transform_1(%arg0: i32) -> (i32, i32) {
    %c0_i32 = arith.constant 0 : i32
    %c0_i32_0 = arith.constant 0 : i32
    return %arg0, %c0_i32 : i32, i32
  }
}

</mosaic_0001>

<llo_original>
// kernel: tpu_custom_call.1
$region0: #{tpu_custom_call.1}
  #allocation0 [shape = 'u32[]', space=smem, size = 0x4, offset = 0x4, fixed_abs, tag = 'smem constant byte address 0x4 - core index']
  #allocation1 [shape = 'u32[144,128]{1,0:T(1,128)}', space=vmem, size = 0x12000, scoped, tag = 'internal scratch']
  %s0 = inlined_call_operand.hbm [shape: f32[8,256], index: 0, kind: input, shape index: {}]
  %s1 = inlined_call_operand.hbm [shape: f32[8,256], index: 1, kind: output, shape index: {}]
  %s2 = sld [smem:[#allocation0]]
  $region18: #{tpu_custom_call.1} parent=0
    _
  %s4 = ssub.s32 1, %s2
  %s5 = scalar_select 0, %s4, %s2
  $region1: #{tpu_custom_call.1} parent=0
    #allocation2 [shape = 'u8[8192]{0}', space=vmem, size = 0x2000, scoped, tag = 'input window, operand 0, single buffered']
    #allocation3 [shape = 's32[1]{0}', space=sflag, size = 0x4, scoped, tag = 'scoped memory for tpu_custom_call.1']
    #allocation4 [shape = 's32[1]{0}', space=sflag, size = 0x4, scoped, tag = 'scoped memory for tpu_custom_call.1']
    #allocation5 [shape = 'u8[8192]{0}', space=vmem, size = 0x2000, scoped, tag = 'output window, operand 0, single buffered']
    %6 = vsyncpa [#allocation3], 0
    %7 = vsyncpa [#allocation4], 0
    // Predicated region
    $region2: #{tpu_custom_call.1} parent=1 // pred_check
      _
    $region3: #{tpu_custom_call.1} parent=1 // pred_check_branch
      %9 = sbr.rel (0) target = $region5
    $region4: #{tpu_custom_call.1} parent=1 // pred_region
      %s11 = ssub.s32 256, 256
      %12 = vsyncadd [#allocation3], %s11
      %s14 = sshll.u32 [#allocation2], 4
      %s15 = int_to_ptr.vmem [resolvable:$true] %s14
      %17 = dma.hbm_to_vmem [thread:$0]  %s0, 256, %s15, [#allocation3]
    $region5: #{tpu_custom_call.1} parent=1 // pred_fallthru
      _
    // Predicated region
    $region6: #{tpu_custom_call.1} parent=1 // pred_check
      _
    $region7: #{tpu_custom_call.1} parent=1 // pred_check_branch
      %19 = sbr.rel (0) target = $region9
    $region8: #{tpu_custom_call.1} parent=1 // pred_region
      %20 = dma.done [#allocation3], 256
    $region9: #{tpu_custom_call.1} parent=1 // pred_fallthru
      _
    %v21 = vld [vmem:[#allocation2] sm:$0xff]
    %v22 = vld [vmem:[#allocation2 + $0x8] sm:$0xff]
    %v23 = vadd.f32 %v21, %v22
    %24 = vadd.xlane.f32.xlu0 %v23
    %v25 = vpop.xlane.xlu0 %24
    %v26 = vmul.f32 %v21, %v21
    %v27 = vmul.f32 %v22, %v22
    %v28 = vadd.f32 %v26, %v27
    %29 = vadd.xlane.f32.xlu0 %v28
    %v30 = vpop.xlane.xlu0 %29
    %v31 = vmul.f32 %v25, 0.00390625
    %v32 = vmul.f32 %v25, %v31
    %v33 = vsub.f32 %v30, %v32
    %v34 = vmul.f32 %v33, 0.003921569
    %v35 = vadd.f32 %v34, 0.0001
    %v36 = vrcp.pop %v35
    %v37 = vmul.f32 0.25, %v36
    %v38 = vsub.f32 %v21, %v31
    %v39 = vsub.f32 %v22, %v31
    %v40 = vmul.f32 %v38, %v38
    %v41 = vmul.f32 %v39, %v39
    %v42 = vmul.f32 %v40, %v37
    %v43 = vmul.f32 %v41, %v37
    %v44 = vadd.f32 %v42, 0.5
    %v45 = vadd.f32 %v43, 0.5
    %v46 = vxor.u32 %v44, 2147483648
    %v47 = vxor.u32 %v45, 2147483648
    %v48 = vmul.f32 %v46, 1.442695
    %v49 = vpow.pop %v48
    %v50 = vmul.f32 %v47, 1.442695
    %v51 = vpow.pop %v50
    %v52 = vadd.f32 %v49, 1.0
    %v53 = vadd.f32 %v51, 1.0
    %v54 = vrcp.pop %v52
    %v55 = vmul.f32 1.0, %v54
    %v56 = vrcp.pop %v53
    %v57 = vmul.f32 1.0, %v56
    %v58 = vmul.f32 %v21, %v55
    %v59 = vmul.f32 %v22, %v57
    %60 = vst [vmem:[#allocation5] sm:$0xff] %v58
    %61 = vst [vmem:[#allocation5 + $0x8] sm:$0xff] %v59
    // Predicated region
    $region10: #{tpu_custom_call.1} parent=1 // pred_check
      _
    $region11: #{tpu_custom_call.1} parent=1 // pred_check_branch
      %63 = sbr.rel (0) target = $region13
    $region12: #{tpu_custom_call.1} parent=1 // pred_region
      %s65 = ssub.s32 256, 256
      %66 = vsyncadd [#allocation4], %s65
      %s68 = sshll.u32 [#allocation5], 4
      %s69 = int_to_ptr.vmem [resolvable:$true] %s68
      %71 = dma.vmem_to_hbm [thread:$0]  %s69, 256, %s1, [#allocation4]
    $region13: #{tpu_custom_call.1} parent=1 // pred_fallthru
      _
    // Predicated region
    $region14: #{tpu_custom_call.1} parent=1 // pred_check
      _
    $region15: #{tpu_custom_call.1} parent=1 // pred_check_branch
      %73 = sbr.rel (0) target = $region17
    $region16: #{tpu_custom_call.1} parent=1 // pred_region
      %74 = dma.done [#allocation4], 256
    $region17: #{tpu_custom_call.1} parent=1 // pred_fallthru
      _
    %75 = vsyncpa [#allocation3], 1
    %76 = vsyncpa [#allocation4], 1

</llo_original>
